<compile_context>
chip_gen: v5e
topology: v5e:2x2
jax: 0.10.0
libtpu: 0.0.40
codegen_flags: <defaults>
</compile_context>

<pallas_src>
import jax
import jax.numpy as jnp
from jax.experimental import pallas as pl
from jax.experimental.pallas import tpu as pltpu

BN_EPS = 1e-5


# ----------------------------------- Pallas kernel -----------------------------------

def tower_gnn_kernel(x_ref, adj_ref, pool_ref, w1_ref, w23_ref, b_ref, out_ref):
    """One grid step == G packed graphs (block-diagonal adjacency exploited).

    x_ref    : [T, Fin]      bf16  packed node features (T = G * nodes_per_graph)
    adj_ref  : [T, T]        bf16  block-diagonal gcn_norm'd adjacency of the G graphs
    pool_ref : [G, T]        bf16  block-diag mean-pool matrix, rows permuted even-then-odd
    w1_ref   : [Fin, H]      bf16  BN-folded conv1 weight
    w23_ref  : [2H, H]       bf16  BN-folded conv2 / conv3 weights stacked on rows
    b_ref    : [3, H]        f32   BN-folded biases (rows: conv1, conv2, conv3)
    out_ref  : [G//2, 2H]    f32   lane-dense pooled embeddings (2 graphs per 128-lane row)
    """
    adj = adj_ref[...]                                    # [T, T]   bf16
    x = x_ref[...]                                        # [T, Fin] bf16

    hidden = w23_ref.shape[1]
    b_all = b_ref[...]                                    # [3, H] f32
    b1, b2, b3 = b_all[0:1, :], b_all[1:2, :], b_all[2:3, :]
    w23 = w23_ref[...]                                    # [2H, H] bf16
    w2, w3 = w23[:hidden, :], w23[hidden:, :]

    # --- GCNConv1 + folded BN1 + ReLU ------------------------------------------------
    # Aggregate first (Fin < H): (adj @ x) @ W1 == adj @ (x @ W1), fewer MXU FLOPs.
    agg1 = jnp.dot(adj, x, preferred_element_type=jnp.float32)            # [T, Fin]
    h = jnp.dot(agg1.astype(jnp.bfloat16), w1_ref[...],
                preferred_element_type=jnp.float32) + b1                   # [T, H]
    h = jnp.maximum(h, 0.0)
    # dropout(p=0.2, training=False) == identity in inference mode

    # --- GCNConv2/3 + folded BN + ReLU: one full-width projection matmul per layer,
    # then one block-diagonal aggregation over all packed graphs -----------------------
    for w, b in ((w2, b2), (w3, b3)):
        hw = jnp.dot(h.astype(jnp.bfloat16), w,
                     preferred_element_type=jnp.float32)                   # [T, H]
        h = jnp.maximum(
            jnp.dot(adj, hw.astype(jnp.bfloat16),
                    preferred_element_type=jnp.float32) + b,
            0.0)

    # --- global_mean_pool for all G graphs in one matmul: [G, T] @ [T, H] -> [G, H] ----
    pooled = jnp.dot(pool_ref[...], h.astype(jnp.bfloat16),
                     preferred_element_type=jnp.float32)                   # [G, H]

    # Lane-dense writeback: rows 0..G/2-1 are even graphs, rows G/2..G-1 odd graphs
    # (pool matrix permutation), so concatenating the halves along lanes packs graphs
    # (2r, 2r+1) side by side into a single unmasked 128-lane store.
    half = pooled.shape[0] // 2
    out_ref[...] = jnp.concatenate([pooled[:half, :], pooled[half:, :]], axis=1)


def tower_gnn_forward(x_flat, adj_flat, pool_mat, w1, w23, b_all, reg_params,
                      num_graphs, graphs_per_step, nodes_per_graph):
    """x_flat: [B*n, Fin] bf16, adj_flat: [(B//G)*T, T] bf16, pool_mat: [G, T] bf16."""
    G = graphs_per_step
    n = nodes_per_graph
    T = G * n
    B = num_graphs
    S = B // G
    fin = x_flat.shape[1]
    hidden = w23.shape[1]
    half = G // 2

    pooled = pl.pallas_call(
        tower_gnn_kernel,
        out_shape=jax.ShapeDtypeStruct((S * half, 2 * hidden), jnp.float32),
        grid=(S,),
        in_specs=[
            pl.BlockSpec((T, fin), lambda s: (s, 0)),            # packed node features
            pl.BlockSpec((T, T), lambda s: (s, 0)),              # block-diag adjacency
            pl.BlockSpec((G, T), lambda s: (0, 0)),              # mean-pool matrix (shared)
            pl.BlockSpec((fin, hidden), lambda s: (0, 0)),       # w1'
            pl.BlockSpec((2 * hidden, hidden), lambda s: (0, 0)),  # [w2'; w3']
            pl.BlockSpec((3, hidden), lambda s: (0, 0)),         # [b1'; b2'; b3']
        ],
        out_specs=pl.BlockSpec((half, 2 * hidden), lambda s: (s, 0)),
        compiler_params=pltpu.CompilerParams(
            # packed-graph axis is independent -> megacore-shardable on v7x
            dimension_semantics=("parallel",),
            # TODO(synk): for much larger graphs, cap the adjacency supertile per
            # generation (v7x has 64 MiB VMEM) and set vmem_limit_bytes / add a
            # reduction grid axis over adjacency columns; unnecessary at T=128.
        ),
    )(x_flat, adj_flat, pool_mat, w1, w23, b_all)

    # Un-interleave the lane-packed output: row r of a step holds graphs (2r, 2r+1)
    # side by side, so a plain row-major reshape recovers graph order exactly.
    pooled = pooled.reshape(B, hidden)

    # Regressor hoisted out of the kernel (trivial [B, H] work): Linear -> ReLU -> Linear.
    rw1, rb1, rw2, rb2 = reg_params
    z = jnp.maximum(pooled @ rw1 + rb1, 0.0)
    return z @ rw2 + rb2


# ---------------------------- parameters / graph construction ----------------------------

def make_params(key, in_channels, hidden_channels, out_channels):
    ks = jax.random.split(key, 8)

    def lin_w(k, fan_in, fan_out):
        return (jax.random.normal(k, (fan_in, fan_out), jnp.float32)
                / jnp.sqrt(jnp.float32(fan_in)))

    def bn_params(h, scale):
        idx = jnp.arange(h, dtype=jnp.float32).reshape(1, h)
        gamma = 1.0 + 0.05 * scale * jnp.cos(idx)
        beta = 0.02 * scale * jnp.sin(idx)
        running_mean = 0.01 * scale * jnp.cos(0.5 * idx)
        running_var = 1.0 + 0.1 * scale * jnp.abs(jnp.sin(0.3 * idx))
        return gamma, beta, running_mean, running_var

    conv_params = []
    dims = [(in_channels, hidden_channels),
            (hidden_channels, hidden_channels),
            (hidden_channels, hidden_channels)]
    for li, (fi, fo) in enumerate(dims):
        w = lin_w(ks[li], fi, fo)
        b = 0.01 * jnp.sin(jnp.arange(fo, dtype=jnp.float32)).reshape(1, fo)
        g, be, m, v = bn_params(fo, float(li + 1))
        conv_params.append((w, b, g, be, m, v))

    rw1 = lin_w(ks[3], hidden_channels, 64)
    rb1 = 0.01 * jnp.cos(jnp.arange(64, dtype=jnp.float32)).reshape(1, 64)
    rw2 = lin_w(ks[4], 64, out_channels)
    rb2 = 0.01 * jnp.sin(jnp.arange(out_channels, dtype=jnp.float32)).reshape(1, out_channels)
    return conv_params, (rw1, rb1, rw2, rb2)


def fold_bn(conv_params):
    """Fold eval-mode BatchNorm into the GCN weight/bias: BN(A(xW)+b) == A(xW') + b'."""
    folded = []
    for (w, b, gamma, beta, mean, var) in conv_params:
        s = gamma / jnp.sqrt(var + BN_EPS)                    # [1, H]
        w_f = (w * s).astype(jnp.bfloat16)                    # [Fin, H]
        b_f = (b * s + beta - mean * s).astype(jnp.float32)   # [1, H]
        folded.append((w_f, b_f))
    return tuple(folded)


def graph_adjacency(n, extra_edge):
    """Undirected ring of n nodes plus one chord; returns gcn_norm'd dense adjacency."""
    # TODO(synk): .at[].set dedups repeated edges; fine here, differs from PyG on multigraphs.
    a = jnp.zeros((n, n), jnp.float32)
    idx = jnp.arange(n)
    a = a.at[idx, (idx + 1) % n].set(1.0)
    a = a.at[(idx + 1) % n, idx].set(1.0)
    i, j = extra_edge
    a = a.at[i, j].set(1.0)
    a = a.at[j, i].set(1.0)
    a = a + jnp.eye(n, dtype=jnp.float32)                     # add self loops
    deg = a.sum(axis=1)
    d = 1.0 / jnp.sqrt(deg)
    return d[:, None] * a * d[None, :]


def block_diag_adjacency(adj3, graphs_per_step):
    """[B, n, n] per-graph adjacency -> [(B//G)*T, T] packed block-diagonal supertiles."""
    B, n, _ = adj3.shape
    G = graphs_per_step
    S = B // G
    T = G * n
    adj4 = adj3.reshape(S, G, n, n)
    eye = jnp.eye(G, dtype=adj3.dtype)
    bd = adj4[:, :, None, :, :] * eye[None, :, :, None, None]   # [S, G, G, n, n]
    bd = bd.transpose(0, 1, 3, 2, 4).reshape(S, T, T)
    return bd.reshape(S * T, T)


def pool_matrix_packed(G, n, dtype):
    """Block-diagonal mean-pool matrix [G, G*n], rows ordered even graphs then odd graphs
    so the kernel can lane-concatenate the halves into a 128-lane-dense output slab."""
    order = jnp.concatenate([jnp.arange(0, G, 2), jnp.arange(1, G, 2)])
    eye = jnp.eye(G, dtype=jnp.float32)[order]                 # [G, G] permuted
    p = jnp.repeat(eye, n, axis=1) / float(n)                  # [G, G*n], entries 1/n (exact in bf16 for n=8)
    return p.astype(dtype)


# ------------------------------------- references -------------------------------------

def reference_forward_f32(x3, adj3_f32, conv_params, reg_params):
    """PyTorch-semantics eval forward (unfolded BN, f32)."""
    h = x3                                                     # [B, n, Fin]
    for (w, b, gamma, beta, mean, var) in conv_params:
        hw = jnp.einsum('bnf,fh->bnh', h, w)
        agg = jnp.einsum('bij,bjh->bih', adj3_f32, hw) + b
        h = jnp.maximum((agg - mean) / jnp.sqrt(var + BN_EPS) * gamma + beta, 0.0)
    pooled = h.mean(axis=1)                                    # global_mean_pool  [B, H]
    rw1, rb1, rw2, rb2 = reg_params
    z = jnp.maximum(pooled @ rw1 + rb1, 0.0)
    return z @ rw2 + rb2


def reference_forward_matched(x3_bf16, adj3_bf16, w1, w23, b_all, reg_params, n):
    """Numerics-matched reference: same bf16-in / f32-accumulate path as the kernel."""
    hidden = w23.shape[1]
    b1, b2, b3 = b_all[0:1], b_all[1:2], b_all[2:3]
    w2, w3 = w23[:hidden], w23[hidden:]

    agg1 = jnp.einsum('bij,bjf->bif', adj3_bf16, x3_bf16,
                      preferred_element_type=jnp.float32)
    h = jnp.einsum('bnf,fh->bnh', agg1.astype(jnp.bfloat16), w1,
                   preferred_element_type=jnp.float32) + b1
    h = jnp.maximum(h, 0.0)
    for (w, b) in ((w2, b2), (w3, b3)):
        hw = jnp.einsum('bnh,hk->bnk', h.astype(jnp.bfloat16), w,
                        preferred_element_type=jnp.float32)
        h = jnp.maximum(
            jnp.einsum('bij,bjk->bik', adj3_bf16, hw.astype(jnp.bfloat16),
                       preferred_element_type=jnp.float32) + b, 0.0)

    pool_row = jnp.full((1, n), 1.0 / n, jnp.bfloat16)
    pooled = jnp.einsum('pn,bnh->bph', pool_row, h.astype(jnp.bfloat16),
                        preferred_element_type=jnp.float32)[:, 0, :]
    rw1, rb1, rw2, rb2 = reg_params
    z = jnp.maximum(pooled @ rw1 + rb1, 0.0)
    return z @ rw2 + rb2


# ----------------------------------------- main -----------------------------------------

if __name__ == "__main__":
    in_channels, hidden_channels, out_channels = 8, 64, 2   # module defaults
    num_graphs, nodes_per_graph = 32, 8
    graphs_per_step = 16            # T = G*n = 128 rows/step; 2 steps (keeps v7x's 2 TCs busy)

    assert num_graphs % graphs_per_step == 0
    assert graphs_per_step % 2 == 0
    assert (graphs_per_step * nodes_per_graph) % 128 == 0

    key = jax.random.PRNGKey(0)
    kx, kp = jax.random.split(key)

    # Node features per graph: [B, n, Fin]
    x3_f32 = jax.random.normal(kx, (num_graphs, nodes_per_graph, in_channels), jnp.float32)

    # Per-graph normalized adjacency: [B, n, n] (chord chosen to avoid ring / self-loop overlap)
    adj3_f32 = jnp.stack(
        [graph_adjacency(nodes_per_graph, (0, 2 + (g % (nodes_per_graph - 4))))
         for g in range(num_graphs)], axis=0)

    conv_params, reg_params = make_params(kp, in_channels, hidden_channels, out_channels)
    (w1, b1), (w2, b2), (w3, b3) = fold_bn(conv_params)
    w23 = jnp.concatenate([w2, w3], axis=0)                  # [2H, H] bf16
    b_all = jnp.concatenate([b1, b2, b3], axis=0)            # [3, H]  f32

    # Packed / flattened kernel inputs (bf16 MXU inputs, f32 accumulation inside)
    x3 = x3_f32.astype(jnp.bfloat16)
    adj3 = adj3_f32.astype(jnp.bfloat16)
    x_flat = x3.reshape(num_graphs * nodes_per_graph, in_channels)
    adj_flat = block_diag_adjacency(adj3_f32, graphs_per_step).astype(jnp.bfloat16)
    pool_mat = pool_matrix_packed(graphs_per_step, nodes_per_graph, jnp.bfloat16)

    out = tower_gnn_forward(x_flat, adj_flat, pool_mat, w1, w23, b_all, reg_params,
                            num_graphs, graphs_per_step, nodes_per_graph)
    out = jax.block_until_ready(out)
    assert out.shape == (num_graphs, out_channels)

    # Tight check against a numerics-matched (bf16 / f32-accumulate) reference.
    ref_matched = reference_forward_matched(x3, adj3, w1, w23, b_all, reg_params,
                                            nodes_per_graph)
    assert jnp.allclose(out, ref_matched, rtol=1e-3, atol=1e-3), (out, ref_matched)

    # Loose check against the full-f32, unfolded-BN (PyTorch-semantics) reference.
    ref_f32 = reference_forward_f32(x3_f32, adj3_f32, conv_params, reg_params)
    assert jnp.allclose(out, ref_f32, rtol=5e-2, atol=5e-2), (out, ref_f32)

    print("KERNEL_OK")
</pallas_src>

<mosaic_0001>
module attributes {stable_mosaic.version = 11 : i64} {
  func.func @tower_gnn_kernel(%arg0: i32, %arg1: memref<128x8xbf16, #tpu.memory_space<vmem>>, %arg2: memref<128x128xbf16, #tpu.memory_space<vmem>>, %arg3: memref<16x128xbf16, #tpu.memory_space<vmem>>, %arg4: memref<8x64xbf16, #tpu.memory_space<vmem>>, %arg5: memref<128x64xbf16, #tpu.memory_space<vmem>>, %arg6: memref<3x64xf32, #tpu.memory_space<vmem>>, %arg7: memref<8x128xf32, #tpu.memory_space<vmem>>) attributes {dimension_semantics = [#tpu.dimension_semantics<parallel>], iteration_bounds = array<i64: 2>, scalar_prefetch = 0 : i64, scratch_operands = 0 : i64, tpu.core_type = #tpu.core_type<tc>, window_params = [{transform_indices = @transform_0, window_bounds = array<i64: 128, 8>}, {transform_indices = @transform_1, window_bounds = array<i64: 128, 128>}, {pipeline_mode = #tpu.pipeline_mode<synchronous>, transform_indices = @transform_2, window_bounds = array<i64: 16, 128>}, {pipeline_mode = #tpu.pipeline_mode<synchronous>, transform_indices = @transform_3, window_bounds = array<i64: 8, 64>}, {pipeline_mode = #tpu.pipeline_mode<synchronous>, transform_indices = @transform_4, window_bounds = array<i64: 128, 64>}, {pipeline_mode = #tpu.pipeline_mode<synchronous>, transform_indices = @transform_5, window_bounds = array<i64: 3, 64>}, {transform_indices = @transform_6, window_bounds = array<i64: 8, 128>}]} {
    %c0 = arith.constant 0 : index
    %c0_0 = arith.constant 0 : index
    %0 = vector.load %arg2[%c0, %c0_0] : memref<128x128xbf16, #tpu.memory_space<vmem>>, vector<128x128xbf16>
    %c0_1 = arith.constant 0 : index
    %c0_2 = arith.constant 0 : index
    %1 = vector.load %arg1[%c0_1, %c0_2] : memref<128x8xbf16, #tpu.memory_space<vmem>>, vector<128x8xbf16>
    %c0_3 = arith.constant 0 : index
    %c0_4 = arith.constant 0 : index
    %2 = vector.load %arg6[%c0_3, %c0_4] : memref<3x64xf32, #tpu.memory_space<vmem>>, vector<3x64xf32>
    %3 = vector.extract_strided_slice %2 {offsets = [0, 0], sizes = [1, 64], strides = [1, 1]} : vector<3x64xf32> to vector<1x64xf32>
    %4 = vector.extract_strided_slice %2 {offsets = [1, 0], sizes = [1, 64], strides = [1, 1]} : vector<3x64xf32> to vector<1x64xf32>
    %5 = vector.extract_strided_slice %2 {offsets = [2, 0], sizes = [1, 64], strides = [1, 1]} : vector<3x64xf32> to vector<1x64xf32>
    %c0_5 = arith.constant 0 : index
    %c0_6 = arith.constant 0 : index
    %6 = vector.load %arg5[%c0_5, %c0_6] : memref<128x64xbf16, #tpu.memory_space<vmem>>, vector<128x64xbf16>
    %7 = vector.extract_strided_slice %6 {offsets = [0, 0], sizes = [64, 64], strides = [1, 1]} : vector<128x64xbf16> to vector<64x64xbf16>
    %8 = vector.extract_strided_slice %6 {offsets = [64, 0], sizes = [64, 64], strides = [1, 1]} : vector<128x64xbf16> to vector<64x64xbf16>
    %cst = arith.constant dense<0.000000e+00> : vector<128x8xf32>
    %9 = tpu.matmul %0, %1, %cst {dimension_numbers = #tpu.dot_dimension_numbers<[1], [0], [0], [1], [0, 0, 1, 1], [], []>} : vector<128x128xbf16>, vector<128x8xbf16>, vector<128x8xf32> -> vector<128x8xf32>
    %10 = arith.truncf %9 : vector<128x8xf32> to vector<128x8xbf16>
    %c0_7 = arith.constant 0 : index
    %c0_8 = arith.constant 0 : index
    %11 = vector.load %arg4[%c0_7, %c0_8] : memref<8x64xbf16, #tpu.memory_space<vmem>>, vector<8x64xbf16>
    %cst_9 = arith.constant dense<0.000000e+00> : vector<128x64xf32>
    %12 = tpu.matmul %10, %11, %cst_9 {dimension_numbers = #tpu.dot_dimension_numbers<[1], [0], [0], [1], [0, 0, 1, 1], [], []>} : vector<128x8xbf16>, vector<8x64xbf16>, vector<128x64xf32> -> vector<128x64xf32>
    %13 = vector.broadcast %3 : vector<1x64xf32> to vector<128x64xf32>
    %14 = arith.addf %12, %13 : vector<128x64xf32>
    %cst_10 = arith.constant 0.000000e+00 : f32
    %15 = vector.broadcast %cst_10 : f32 to vector<128x64xf32>
    %16 = arith.maximumf %14, %15 : vector<128x64xf32>
    %17 = arith.truncf %16 : vector<128x64xf32> to vector<128x64xbf16>
    %cst_11 = arith.constant dense<0.000000e+00> : vector<128x64xf32>
    %18 = tpu.matmul %17, %7, %cst_11 {dimension_numbers = #tpu.dot_dimension_numbers<[1], [0], [0], [1], [0, 0, 1, 1], [], []>} : vector<128x64xbf16>, vector<64x64xbf16>, vector<128x64xf32> -> vector<128x64xf32>
    %19 = arith.truncf %18 : vector<128x64xf32> to vector<128x64xbf16>
    %cst_12 = arith.constant dense<0.000000e+00> : vector<128x64xf32>
    %20 = tpu.matmul %0, %19, %cst_12 {dimension_numbers = #tpu.dot_dimension_numbers<[1], [0], [0], [1], [0, 0, 1, 1], [], []>} : vector<128x128xbf16>, vector<128x64xbf16>, vector<128x64xf32> -> vector<128x64xf32>
    %21 = vector.broadcast %4 : vector<1x64xf32> to vector<128x64xf32>
    %22 = arith.addf %20, %21 : vector<128x64xf32>
    %cst_13 = arith.constant 0.000000e+00 : f32
    %23 = vector.broadcast %cst_13 : f32 to vector<128x64xf32>
    %24 = arith.maximumf %22, %23 : vector<128x64xf32>
    %25 = arith.truncf %24 : vector<128x64xf32> to vector<128x64xbf16>
    %cst_14 = arith.constant dense<0.000000e+00> : vector<128x64xf32>
    %26 = tpu.matmul %25, %8, %cst_14 {dimension_numbers = #tpu.dot_dimension_numbers<[1], [0], [0], [1], [0, 0, 1, 1], [], []>} : vector<128x64xbf16>, vector<64x64xbf16>, vector<128x64xf32> -> vector<128x64xf32>
    %27 = arith.truncf %26 : vector<128x64xf32> to vector<128x64xbf16>
    %cst_15 = arith.constant dense<0.000000e+00> : vector<128x64xf32>
    %28 = tpu.matmul %0, %27, %cst_15 {dimension_numbers = #tpu.dot_dimension_numbers<[1], [0], [0], [1], [0, 0, 1, 1], [], []>} : vector<128x128xbf16>, vector<128x64xbf16>, vector<128x64xf32> -> vector<128x64xf32>
    %29 = vector.broadcast %5 : vector<1x64xf32> to vector<128x64xf32>
    %30 = arith.addf %28, %29 : vector<128x64xf32>
    %cst_16 = arith.constant 0.000000e+00 : f32
    %31 = vector.broadcast %cst_16 : f32 to vector<128x64xf32>
    %32 = arith.maximumf %30, %31 : vector<128x64xf32>
    %c0_17 = arith.constant 0 : index
    %c0_18 = arith.constant 0 : index
    %33 = vector.load %arg3[%c0_17, %c0_18] : memref<16x128xbf16, #tpu.memory_space<vmem>>, vector<16x128xbf16>
    %34 = arith.truncf %32 : vector<128x64xf32> to vector<128x64xbf16>
    %cst_19 = arith.constant dense<0.000000e+00> : vector<16x64xf32>
    %35 = tpu.matmul %33, %34, %cst_19 {dimension_numbers = #tpu.dot_dimension_numbers<[1], [0], [0], [1], [0, 0, 1, 1], [], []>} : vector<16x128xbf16>, vector<128x64xbf16>, vector<16x64xf32> -> vector<16x64xf32>
    %36 = vector.extract_strided_slice %35 {offsets = [0, 0], sizes = [8, 64], strides = [1, 1]} : vector<16x64xf32> to vector<8x64xf32>
    %37 = vector.extract_strided_slice %35 {offsets = [8, 0], sizes = [8, 64], strides = [1, 1]} : vector<16x64xf32> to vector<8x64xf32>
    %38 = tpu.concatenate %36, %37 in 1 : vector<8x64xf32>, vector<8x64xf32> -> vector<8x128xf32>
    %c0_20 = arith.constant 0 : index
    %c0_21 = arith.constant 0 : index
    %39 = vector.load %arg7[%c0_20, %c0_21] : memref<8x128xf32, #tpu.memory_space<vmem>>, vector<8x128xf32>
    tpu.vector_store %arg7[%c0_20, %c0_21], %38 {strides = array<i32>} : memref<8x128xf32, #tpu.memory_space<vmem>>, vector<8x128xf32>,
    return
  }
  func.func @transform_0(%arg0: i32) -> (i32, i32) {
    %c0_i32 = arith.constant 0 : i32
    %c0_i32_0 = arith.constant 0 : i32
    return %arg0, %c0_i32 : i32, i32
  }
  func.func @transform_1(%arg0: i32) -> (i32, i32) {
    %c0_i32 = arith.constant 0 : i32
    %c0_i32_0 = arith.constant 0 : i32
    return %arg0, %c0_i32 : i32, i32
  }
  func.func @transform_2(%arg0: i32) -> (i32, i32) {
    %c0_i32 = arith.constant 0 : i32
    %c0_i32_0 = arith.constant 0 : i32
    %c0_i32_1 = arith.constant 0 : i32
    return %c0_i32, %c0_i32_0 : i32, i32
  }
  func.func @transform_3(%arg0: i32) -> (i32, i32) {
    %c0_i32 = arith.constant 0 : i32
    %c0_i32_0 = arith.constant 0 : i32
    %c0_i32_1 = arith.constant 0 : i32
    return %c0_i32, %c0_i32_0 : i32, i32
  }
  func.func @transform_4(%arg0: i32) -> (i32, i32) {
    %c0_i32 = arith.constant 0 : i32
    %c0_i32_0 = arith.constant 0 : i32
    %c0_i32_1 = arith.constant 0 : i32
    return %c0_i32, %c0_i32_0 : i32, i32
  }
  func.func @transform_5(%arg0: i32) -> (i32, i32) {
    %c0_i32 = arith.constant 0 : i32
    %c0_i32_0 = arith.constant 0 : i32
    %c0_i32_1 = arith.constant 0 : i32
    return %c0_i32, %c0_i32_0 : i32, i32
  }
  func.func @transform_6(%arg0: i32) -> (i32, i32) {
    %c0_i32 = arith.constant 0 : i32
    %c0_i32_0 = arith.constant 0 : i32
    return %arg0, %c0_i32 : i32, i32
  }
}

</mosaic_0001>

<llo_original>
// kernel: tpu_custom_call.1
$region0: #{tpu_custom_call.1}
  #allocation0 [shape = 'u32[]', space=smem, size = 0x4, offset = 0x4, fixed_abs, tag = 'smem constant byte address 0x4 - core index']
  #allocation1 [shape = 'u32[72,128]{1,0:T(1,128)}', space=vmem, size = 0x9000, scoped, tag = 'internal scratch']
  %s0 = inlined_call_operand.vmem [shape: bf16[256,8], index: 0, kind: input, shape index: {}]
  %s1 = inlined_call_operand.vmem [shape: bf16[256,128], index: 1, kind: input, shape index: {}]
  %s2 = inlined_call_operand.vmem [shape: bf16[16,128], index: 2, kind: input, shape index: {}]
  %s3 = inlined_call_operand.vmem [shape: bf16[8,64], index: 3, kind: input, shape index: {}]
  %s4 = inlined_call_operand.vmem [shape: bf16[128,64], index: 4, kind: input, shape index: {}]
  %s5 = inlined_call_operand.vmem [shape: f32[3,64], index: 5, kind: input, shape index: {}]
  %s6 = inlined_call_operand.hbm [shape: f32[16,128], index: 6, kind: output, shape index: {}]
  %s7 = sld [smem:[#allocation0]]
  $region57: #{tpu_custom_call.1} parent=0
    _
  %s9 = ssub.s32 1, %s7
  %s10 = scalar_select 0, %s9, %s7
  $region1: #{tpu_custom_call.1} parent=0
    #allocation2 [shape = 'u8[8192]{0}', space=vmem, size = 0x2000, scoped, tag = 'output window, operand 0']
    #allocation3 [shape = 's32[2]{0}', space=sflag, size = 0x8, scoped, tag = 'scoped memory for tpu_custom_call.1']
    %11 = vsyncpa [#allocation3], 0
    %s12 = scalar_lea.sflag [#allocation3], 1
    %13 = vsyncpa %s12, 0
    loop: start=0, step=1, limit=4
    $region2: #{tpu_custom_call.1} parent=1 // loop_pre_header
      _
    $region3: #{tpu_custom_call.1} parent=1 // loop_header
      %s15 = sphi 0, %s19
      %p16 = scmp.ge.s32.totalorder %s15, 4
      %s25 = sphi 0, %s27
      %s28 = sphi 0, %s25
      %s29 = sphi 0, %s28
      %s45 = sphi 0, %s29
      %s51 = sphi 0, %s53
      %s54 = sphi 0, %s51
      %s55 = sphi 0, %s54
      %s71 = sphi 0, %s55
      %s75 = sphi 0, %s75
      %s77 = sphi 0, %s75
      %s78 = sphi 0, %s77
      %s92 = sphi 0, %s78
      %s96 = sphi 0, %s96
      %s98 = sphi 0, %s96
      %s99 = sphi 0, %s98
      %s113 = sphi 0, %s99
      %s117 = sphi 0, %s117
      %s119 = sphi 0, %s117
      %s120 = sphi 0, %s119
      %s134 = sphi 0, %s120
      %s138 = sphi 0, %s138
      %s140 = sphi 0, %s138
      %s141 = sphi 0, %s140
      %s155 = sphi 0, %s141
      %s161 = sphi 0, %s163
      %s164 = sphi 0, %s161
      %s165 = sphi 0, %s164
      %s181 = sphi 0, %s165
    $region4: #{tpu_custom_call.1} parent=1 // loop_header_branch
      %18 = sbr.rel (%p16) target = $region8
    $region5: #{tpu_custom_call.1} parent=1 // loop_body
      %s20 = ssub.s32 %s15, 1
      %s21 = ssub.s32 %s15, 2
      %s22 = sadd.s32 %s15, 1
      %s23 = ssub.s32 %s15, %s22
      %p24 = scmp.eq.s32.totalorder %s23, 0
      %s26 = sadd.s32 %s25, 1
      %s27 = scalar_select %p24, %s25, %s26
      %p30 = pneg %p24
      %p31 = scmp.eq.s32.totalorder %s15, 1
      %p32 = por %p30, %p31
      %p33 = scmp.ne.s32.totalorder %s25, %s28
      %p34 = scmp.eq.s32.totalorder %s15, 0
      %p35 = por %p33, %p34
      %p36 = scmp.ne.s32.totalorder %s25, %s28
      %p37 = scmp.eq.s32.totalorder %s20, 1
      %p38 = por %p36, %p37
      %p39 = scmp.ne.s32.totalorder %s28, %s29
      %p40 = scmp.eq.s32.totalorder %s20, 0
      %p41 = por %p39, %p40
      %p42 = scmp.ne.s32.totalorder %s28, %s29
      %p43 = scmp.eq.s32.totalorder %s21, 1
      %p44 = por %p42, %p43
      %p46 = scmp.ne.s32.totalorder %s29, %s45
      %p47 = scmp.eq.s32.totalorder %s21, 0
      %p48 = por %p46, %p47
      %s49 = ssub.s32 %s15, %s22
      %p50 = scmp.eq.s32.totalorder %s49, 0
      %s52 = sadd.s32 %s51, 1
      %s53 = scalar_select %p50, %s51, %s52
      %p56 = pneg %p50
      %p57 = scmp.eq.s32.totalorder %s15, 1
      %p58 = por %p56, %p57
      %p59 = scmp.ne.s32.totalorder %s51, %s54
      %p60 = scmp.eq.s32.totalorder %s15, 0
      %p61 = por %p59, %p60
      %p62 = scmp.ne.s32.totalorder %s51, %s54
      %p63 = scmp.eq.s32.totalorder %s20, 1
      %p64 = por %p62, %p63
      %p65 = scmp.ne.s32.totalorder %s54, %s55
      %p66 = scmp.eq.s32.totalorder %s20, 0
      %p67 = por %p65, %p66
      %p68 = scmp.ne.s32.totalorder %s54, %s55
      %p69 = scmp.eq.s32.totalorder %s21, 1
      %p70 = por %p68, %p69
      %p72 = scmp.ne.s32.totalorder %s55, %s71
      %p73 = scmp.eq.s32.totalorder %s21, 0
      %p74 = por %p72, %p73
      %s76 = sadd.s32 %s75, 1
      %p79 = scmp.eq.s32.totalorder %s15, 1
      %p80 = scmp.ne.s32.totalorder %s75, %s77
      %p81 = scmp.eq.s32.totalorder %s15, 0
      %p82 = por %p80, %p81
      %p83 = scmp.ne.s32.totalorder %s75, %s77
      %p84 = scmp.eq.s32.totalorder %s20, 1
      %p85 = por %p83, %p84
      %p86 = scmp.ne.s32.totalorder %s77, %s78
      %p87 = scmp.eq.s32.totalorder %s20, 0
      %p88 = por %p86, %p87
      %p89 = scmp.ne.s32.totalorder %s77, %s78
      %p90 = scmp.eq.s32.totalorder %s21, 1
      %p91 = por %p89, %p90
      %p93 = scmp.ne.s32.totalorder %s78, %s92
      %p94 = scmp.eq.s32.totalorder %s21, 0
      %p95 = por %p93, %p94
      %s97 = sadd.s32 %s96, 1
      %p100 = scmp.eq.s32.totalorder %s15, 1
      %p101 = scmp.ne.s32.totalorder %s96, %s98
      %p102 = scmp.eq.s32.totalorder %s15, 0
      %p103 = por %p101, %p102
      %p104 = scmp.ne.s32.totalorder %s96, %s98
      %p105 = scmp.eq.s32.totalorder %s20, 1
      %p106 = por %p104, %p105
      %p107 = scmp.ne.s32.totalorder %s98, %s99
      %p108 = scmp.eq.s32.totalorder %s20, 0
      %p109 = por %p107, %p108
      %p110 = scmp.ne.s32.totalorder %s98, %s99
      %p111 = scmp.eq.s32.totalorder %s21, 1
      %p112 = por %p110, %p111
      %p114 = scmp.ne.s32.totalorder %s99, %s113
      %p115 = scmp.eq.s32.totalorder %s21, 0
      %p116 = por %p114, %p115
      %s118 = sadd.s32 %s117, 1
      %p121 = scmp.eq.s32.totalorder %s15, 1
      %p122 = scmp.ne.s32.totalorder %s117, %s119
      %p123 = scmp.eq.s32.totalorder %s15, 0
      %p124 = por %p122, %p123
      %p125 = scmp.ne.s32.totalorder %s117, %s119
      %p126 = scmp.eq.s32.totalorder %s20, 1
      %p127 = por %p125, %p126
      %p128 = scmp.ne.s32.totalorder %s119, %s120
      %p129 = scmp.eq.s32.totalorder %s20, 0
      %p130 = por %p128, %p129
      %p131 = scmp.ne.s32.totalorder %s119, %s120
      %p132 = scmp.eq.s32.totalorder %s21, 1
      %p133 = por %p131, %p132
      %p135 = scmp.ne.s32.totalorder %s120, %s134
      %p136 = scmp.eq.s32.totalorder %s21, 0
      %p137 = por %p135, %p136
      %s139 = sadd.s32 %s138, 1
      %p142 = scmp.eq.s32.totalorder %s15, 1
      %p143 = scmp.ne.s32.totalorder %s138, %s140
      %p144 = scmp.eq.s32.totalorder %s15, 0
      %p145 = por %p143, %p144
      %p146 = scmp.ne.s32.totalorder %s138, %s140
      %p147 = scmp.eq.s32.totalorder %s20, 1
      %p148 = por %p146, %p147
      %p149 = scmp.ne.s32.totalorder %s140, %s141
      %p150 = scmp.eq.s32.totalorder %s20, 0
      %p151 = por %p149, %p150
      %p152 = scmp.ne.s32.totalorder %s140, %s141
      %p153 = scmp.eq.s32.totalorder %s21, 1
      %p154 = por %p152, %p153
      %p156 = scmp.ne.s32.totalorder %s141, %s155
      %p157 = scmp.eq.s32.totalorder %s21, 0
      %p158 = por %p156, %p157
      %s159 = ssub.s32 %s15, %s22
      %p160 = scmp.eq.s32.totalorder %s159, 0
      %s162 = sadd.s32 %s161, 1
      %s163 = scalar_select %p160, %s161, %s162
      %p166 = pneg %p160
      %p167 = scmp.eq.s32.totalorder %s15, 1
      %p168 = por %p166, %p167
      %p169 = scmp.ne.s32.totalorder %s161, %s164
      %p170 = scmp.eq.s32.totalorder %s15, 0
      %p171 = por %p169, %p170
      %p172 = scmp.ne.s32.totalorder %s161, %s164
      %p173 = scmp.eq.s32.totalorder %s20, 1
      %p174 = por %p172, %p173
      %p175 = scmp.ne.s32.totalorder %s164, %s165
      %p176 = scmp.eq.s32.totalorder %s20, 0
      %p177 = por %p175, %p176
      %p178 = scmp.ne.s32.totalorder %s164, %s165
      %p179 = scmp.eq.s32.totalorder %s21, 1
      %p180 = por %p178, %p179
      %p182 = scmp.ne.s32.totalorder %s165, %s181
      %p183 = scmp.eq.s32.totalorder %s21, 0
      %p184 = por %p182, %p183
      %p185 = scmp.le.s32.totalorder 1, %s15
      %p186 = scmp.lt.s32.totalorder %s15, 3
      %p187 = pnand %p185, %p186
      %p188 = pneg %p187
      // Predicated region
      $region9: #{tpu_custom_call.1} parent=5 // pred_check
        _
      $region10: #{tpu_custom_call.1} parent=5 // pred_check_branch
        %190 = sbr.rel (%p187) target = $region12
      $region11: #{tpu_custom_call.1} parent=5 // pred_region
        %s191 = ssub.s32 %s15, 1
        // Predicated region
        $region13: #{tpu_custom_call.1} parent=11 // pred_check
          %p192 = pneg %p88
        $region14: #{tpu_custom_call.1} parent=11 // pred_check_branch
          %194 = sbr.rel (%p192) target = $region16
        $region15: #{tpu_custom_call.1} parent=11 // pred_region
          _
        $region16: #{tpu_custom_call.1} parent=11 // pred_fallthru
          _
        // Predicated region
        $region17: #{tpu_custom_call.1} parent=11 // pred_check
          %p195 = pneg %p109
        $region18: #{tpu_custom_call.1} parent=11 // pred_check_branch
          %197 = sbr.rel (%p195) target = $region20
        $region19: #{tpu_custom_call.1} parent=11 // pred_region
          _
        $region20: #{tpu_custom_call.1} parent=11 // pred_fallthru
          _
        // Predicated region
        $region21: #{tpu_custom_call.1} parent=11 // pred_check
          %p198 = pneg %p130
        $region22: #{tpu_custom_call.1} parent=11 // pred_check_branch
          %200 = sbr.rel (%p198) target = $region24
        $region23: #{tpu_custom_call.1} parent=11 // pred_region
          _
        $region24: #{tpu_custom_call.1} parent=11 // pred_fallthru
          _
        // Predicated region
        $region25: #{tpu_custom_call.1} parent=11 // pred_check
          %p201 = pneg %p151
        $region26: #{tpu_custom_call.1} parent=11 // pred_check_branch
          %203 = sbr.rel (%p201) target = $region28
        $region27: #{tpu_custom_call.1} parent=11 // pred_region
          _
        $region28: #{tpu_custom_call.1} parent=11 // pred_fallthru
          _
      $region12: #{tpu_custom_call.1} parent=5 // pred_fallthru
        _
      %p204 = scmp.lt.s32.totalorder %s15, 2
      // Predicated region
      $region29: #{tpu_custom_call.1} parent=5 // pred_check
        %p205 = pneg %p204
      $region30: #{tpu_custom_call.1} parent=5 // pred_check_branch
        %207 = sbr.rel (%p205) target = $region32
      $region31: #{tpu_custom_call.1} parent=5 // pred_region
        // Predicated region
        $region33: #{tpu_custom_call.1} parent=31 // pred_check
          %p208 = pneg %p35
        $region34: #{tpu_custom_call.1} parent=31 // pred_check_branch
          %210 = sbr.rel (%p208) target = $region36
        $region35: #{tpu_custom_call.1} parent=31 // pred_region
          %s211 = smul.u32 16, %s15
          %p212 = scmp.lt.s32.totalorder %s211, 31
          %s213 = scalar_select %p212, %s211, 31
          %s214 = smul.addr %s213, 4
          %s215 = scalar_lea.vmem %s0, %s214
          %s216 = smul.u32 16, %s15
        $region36: #{tpu_custom_call.1} parent=31 // pred_fallthru
          _
        // Predicated region
        $region37: #{tpu_custom_call.1} parent=31 // pred_check
          %p217 = pneg %p61
        $region38: #{tpu_custom_call.1} parent=31 // pred_check_branch
          %219 = sbr.rel (%p217) target = $region40
        $region39: #{tpu_custom_call.1} parent=31 // pred_region
          %s220 = smul.u32 16, %s15
          %p221 = scmp.lt.s32.totalorder %s220, 31
          %s222 = scalar_select %p221, %s220, 31
          %s223 = smul.addr %s222, 4
          %s224 = scalar_lea.vmem %s1, %s223
          %s225 = smul.u32 16, %s15
        $region40: #{tpu_custom_call.1} parent=31 // pred_fallthru
          _
      $region32: #{tpu_custom_call.1} parent=5 // pred_fallthru
        _
      %p226 = scmp.le.s32.totalorder 1, %s15
      %p227 = scmp.lt.s32.totalorder %s15, 3
      %p228 = pnand %p226, %p227
      %p229 = pneg %p228
      // Predicated region
      $region41: #{tpu_custom_call.1} parent=5 // pred_check
        _
      $region42: #{tpu_custom_call.1} parent=5 // pred_check_branch
        %231 = sbr.rel (%p228) target = $region44
      $region43: #{tpu_custom_call.1} parent=5 // pred_region
        %s232 = ssub.s32 %s15, 1
        %s233 = smul.u32 16, %s20
        %p234 = scmp.lt.s32.totalorder %s233, 31
        %s235 = scalar_select %p234, %s233, 31
        %s236 = smul.addr %s235, 4
        %s237 = scalar_lea.vmem %s0, %s236
        %p238 = pneg %p41
        %p239 = pneg %p38
        %s240 = smul.u32 16, %s20
        %p241 = scmp.lt.s32.totalorder %s240, 31
        %s242 = scalar_select %p241, %s240, 31
        %s243 = smul.addr %s242, 4
        %s244 = scalar_lea.vmem %s1, %s243
        %p245 = pneg %p67
        %p246 = pneg %p64
        %p247 = pneg %p88
        %p248 = pneg %p85
        %p249 = pneg %p109
        %p250 = pneg %p106
        %p251 = pneg %p130
        %p252 = pneg %p127
        %p253 = pneg %p151
        %p254 = pneg %p148
        %p255 = pneg %p177
        %p256 = pneg %p174
        %s257 = sand.u32 %s164, 1
        %s258 = scalar_lea.sflag [#allocation3], %s257
        %s259 = sand.u32 %s164, 1
        %s260 = smul.addr %s259, 8
        %s261 = scalar_lea.vmem [#allocation2], %s260
        %s262 = smul.u32 16, %s20
        %p263 = scmp.lt.s32.totalorder %s262, 31
        %s264 = scalar_select %p263, %s262, 31
        %s265 = smul.addr %s264, 4
        %s266 = scalar_lea.vmem %s0, %s265
        %s267 = smul.u32 16, %s20
        %s268 = smul.u32 16, %s20
        %p269 = scmp.lt.s32.totalorder %s268, 31
        %s270 = scalar_select %p269, %s268, 31
        %s271 = smul.addr %s270, 4
        %s272 = scalar_lea.vmem %s1, %s271
        %s273 = smul.u32 16, %s20
        %v275 = vld [vmem:[%s272] sm:$0xf]
        %v276 = vld [vmem:[%s272 + $0x4] sm:$0xf]
        %v277 = vld [vmem:[%s272 + $0x8] sm:$0xf]
        %v278 = vld [vmem:[%s272 + $0xc] sm:$0xf]
        %v279 = vld [vmem:[%s272 + $0x10] sm:$0xf]
        %v280 = vld [vmem:[%s272 + $0x14] sm:$0xf]
        %v281 = vld [vmem:[%s272 + $0x18] sm:$0xf]
        %v282 = vld [vmem:[%s272 + $0x1c] sm:$0xf]
        %v283 = vld [vmem:[%s272 + $0x20] sm:$0xf]
        %v284 = vld [vmem:[%s272 + $0x24] sm:$0xf]
        %v285 = vld [vmem:[%s272 + $0x28] sm:$0xf]
        %v286 = vld [vmem:[%s272 + $0x2c] sm:$0xf]
        %v287 = vld [vmem:[%s272 + $0x30] sm:$0xf]
        %v288 = vld [vmem:[%s272 + $0x34] sm:$0xf]
        %v289 = vld [vmem:[%s272 + $0x38] sm:$0xf]
        %v290 = vld [vmem:[%s272 + $0x3c] sm:$0xf]
        %v291 = vld [vmem:[%s266] sm:$0xf]
        %v292 = vld [vmem:[%s266 + $0x4] sm:$0xf]
        %v293 = vld [vmem:[%s266 + $0x8] sm:$0xf]
        %v294 = vld [vmem:[%s266 + $0xc] sm:$0xf]
        %v295 = vld [vmem:[%s266 + $0x10] sm:$0xf]
        %v296 = vld [vmem:[%s266 + $0x14] sm:$0xf]
        %v297 = vld [vmem:[%s266 + $0x18] sm:$0xf]
        %v298 = vld [vmem:[%s266 + $0x1c] sm:$0xf]
        %v299 = vld [vmem:[%s266 + $0x20] sm:$0xf]
        %v300 = vld [vmem:[%s266 + $0x24] sm:$0xf]
        %v301 = vld [vmem:[%s266 + $0x28] sm:$0xf]
        %v302 = vld [vmem:[%s266 + $0x2c] sm:$0xf]
        %v303 = vld [vmem:[%s266 + $0x30] sm:$0xf]
        %v304 = vld [vmem:[%s266 + $0x34] sm:$0xf]
        %v305 = vld [vmem:[%s266 + $0x38] sm:$0xf]
        %v306 = vld [vmem:[%s266 + $0x3c] sm:$0xf]
        %v307 = vld [vmem:[%s5] sm:$0x7]
        %v308 = vld [vmem:[%s4] sm:$0xf]
        %v309 = vld [vmem:[%s4 + $0x4] sm:$0xf]
        %v310 = vld [vmem:[%s4 + $0x8] sm:$0xf]
        %v311 = vld [vmem:[%s4 + $0xc] sm:$0xf]
        %v312 = vld [vmem:[%s4 + $0x10] sm:$0xf]
        %v313 = vld [vmem:[%s4 + $0x14] sm:$0xf]
        %v314 = vld [vmem:[%s4 + $0x18] sm:$0xf]
        %v315 = vld [vmem:[%s4 + $0x1c] sm:$0xf]
        %v316 = vld [vmem:[%s4 + $0x20] sm:$0xf]
        %v317 = vld [vmem:[%s4 + $0x24] sm:$0xf]
        %v318 = vld [vmem:[%s4 + $0x28] sm:$0xf]
        %v319 = vld [vmem:[%s4 + $0x2c] sm:$0xf]
        %v320 = vld [vmem:[%s4 + $0x30] sm:$0xf]
        %v321 = vld [vmem:[%s4 + $0x34] sm:$0xf]
        %v322 = vld [vmem:[%s4 + $0x38] sm:$0xf]
        %v323 = vld [vmem:[%s4 + $0x3c] sm:$0xf]
        %v340 = vunpack.c.l.b16 %v275
        %v341 = vunpack.c.l.b16 %v276
        %v342 = vunpack.c.l.b16 %v277
        %v343 = vunpack.c.l.b16 %v278
        %v344 = vunpack.c.l.b16 %v279
        %v345 = vunpack.c.l.b16 %v280
        %v346 = vunpack.c.l.b16 %v281
        %v347 = vunpack.c.l.b16 %v282
        %v348 = vunpack.c.l.b16 %v283
        %v349 = vunpack.c.l.b16 %v284
        %v350 = vunpack.c.l.b16 %v285
        %v351 = vunpack.c.l.b16 %v286
        %v352 = vunpack.c.l.b16 %v287
        %v353 = vunpack.c.l.b16 %v288
        %v354 = vunpack.c.l.b16 %v289
        %v355 = vunpack.c.l.b16 %v290
        %v356 = vpack.c.b16 %v341, %v340
        %v357 = vpack.c.b16 %v343, %v342
        %v358 = vpack.c.b16 %v345, %v344
        %v359 = vpack.c.b16 %v347, %v346
        %v360 = vpack.c.b16 %v349, %v348
        %v361 = vpack.c.b16 %v351, %v350
        %v362 = vpack.c.b16 %v353, %v352
        %v363 = vpack.c.b16 %v355, %v354
        %v388 = vunpack.c.l.b16 %v291
        %v389 = vunpack.c.l.b16 %v292
        %v390 = vunpack.c.l.b16 %v293
        %v391 = vunpack.c.l.b16 %v294
        %v392 = vunpack.c.l.b16 %v295
        %v393 = vunpack.c.l.b16 %v296
        %v394 = vunpack.c.l.b16 %v297
        %v395 = vunpack.c.l.b16 %v298
        %v396 = vunpack.c.l.b16 %v299
        %v397 = vunpack.c.l.b16 %v300
        %v398 = vunpack.c.l.b16 %v301
        %v399 = vunpack.c.l.b16 %v302
        %v400 = vunpack.c.l.b16 %v303
        %v401 = vunpack.c.l.b16 %v304
        %v402 = vunpack.c.l.b16 %v305
        %v403 = vunpack.c.l.b16 %v306
        %v404 = vpack.c.b16 %v389, %v388
        %v405 = vpack.c.b16 %v391, %v390
        %v406 = vpack.c.b16 %v393, %v392
        %v407 = vpack.c.b16 %v395, %v394
        %v408 = vpack.c.b16 %v397, %v396
        %v409 = vpack.c.b16 %v399, %v398
        %v410 = vpack.c.b16 %v401, %v400
        %v411 = vpack.c.b16 %v403, %v402
        %420 = vmatpush.bf16.msra.mxu0 %v411
        %421 = vmatpush.bf16.msra.mxu0 %v410
        %422 = vmatpush.bf16.msra.mxu0 %v409
        %423 = vmatpush.bf16.msra.mxu0 %v408
        %424 = vmatpush.bf16.msra.mxu0 %v407
        %425 = vmatpush.bf16.msra.mxu0 %v406
        %426 = vmatpush.bf16.msra.mxu0 %v405
        %427 = vmatpush.bf16.msra.mxu0 %v404
        %428 = vmatmul.bf16.gmra.mxu0 %v356
        %v429 = vpop.f32.mrf.mxu0
        %v430 = vadd.f32 0.0, %v429
        %v431 = vpop.f32.mrf.mxu0
        %v432 = vadd.f32 0.0, %v431
        %433 = vmatmul.bf16.gmra.mxu0 %v357
        %v434 = vpop.f32.mrf.mxu0
        %v435 = vadd.f32 0.0, %v434
        %v436 = vpop.f32.mrf.mxu0
        %v437 = vadd.f32 0.0, %v436
        %438 = vmatmul.bf16.gmra.mxu0 %v358
        %v439 = vpop.f32.mrf.mxu0
        %v440 = vadd.f32 0.0, %v439
        %v441 = vpop.f32.mrf.mxu0
        %v442 = vadd.f32 0.0, %v441
        %443 = vmatmul.bf16.gmra.mxu0 %v359
        %v444 = vpop.f32.mrf.mxu0
        %v445 = vadd.f32 0.0, %v444
        %v446 = vpop.f32.mrf.mxu0
        %v447 = vadd.f32 0.0, %v446
        %448 = vmatmul.bf16.gmra.mxu0 %v360
        %v449 = vpop.f32.mrf.mxu0
        %v450 = vadd.f32 0.0, %v449
        %v451 = vpop.f32.mrf.mxu0
        %v452 = vadd.f32 0.0, %v451
        %453 = vmatmul.bf16.gmra.mxu0 %v361
        %v454 = vpop.f32.mrf.mxu0
        %v455 = vadd.f32 0.0, %v454
        %v456 = vpop.f32.mrf.mxu0
        %v457 = vadd.f32 0.0, %v456
        %458 = vmatmul.bf16.gmra.mxu0 %v362
        %v459 = vpop.f32.mrf.mxu0
        %v460 = vadd.f32 0.0, %v459
        %v461 = vpop.f32.mrf.mxu0
        %v462 = vadd.f32 0.0, %v461
        %463 = vmatmul.bf16.gmra.mxu0 %v363
        %v464 = vpop.f32.mrf.mxu0
        %v465 = vadd.f32 0.0, %v464
        %v466 = vpop.f32.mrf.mxu0
        %v467 = vadd.f32 0.0, %v466
        %468 = vdwg.mxu0
        %v469 = vpack.c.bf16 %v432, %v430
        %v470 = vpack.c.bf16 %v437, %v435
        %v471 = vpack.c.bf16 %v442, %v440
        %v472 = vpack.c.bf16 %v447, %v445
        %v473 = vpack.c.bf16 %v452, %v450
        %v474 = vpack.c.bf16 %v457, %v455
        %v475 = vpack.c.bf16 %v462, %v460
        %v476 = vpack.c.bf16 %v467, %v465
        %v477 = vld [vmem:[%s3] sm:$0xf]
        %v478 = vperm.slane %v307, 0
        %vm479 = vcmask 64512
        %v481 = vsel %vm479, %v469, 0
        %v484 = vsel %vm479, %v470, 0
        %v487 = vsel %vm479, %v471, 0
        %v490 = vsel %vm479, %v472, 0
        %v493 = vsel %vm479, %v473, 0
        %v496 = vsel %vm479, %v474, 0
        %v499 = vsel %vm479, %v475, 0
        %v502 = vsel %vm479, %v476, 0
        %vm504 = vcmask 1043456
        %v506 = vsel %vm504, %v477, 0
        %508 = vmatpush.bf16.msra.mxu0 0
        %509 = vmatpush.bf16.msra.mxu0 0
        %510 = vmatpush.bf16.msra.mxu0 0
        %511 = vmatpush.bf16.msra.mxu0 0
        %512 = vmatpush.bf16.msra.mxu0 0
        %513 = vmatpush.bf16.msra.mxu0 0
        %514 = vmatpush.bf16.msra.mxu0 0
        %515 = vmatpush.bf16.msra.mxu0 %v506
        %516 = vmatmul.bf16.gmra.mxu0 %v481
        %v517 = vpop.f32.mrf.mxu0
        %v518 = vadd.f32 %v478, %v517
        %v519 = vpop.f32.mrf.mxu0
        %v520 = vadd.f32 %v478, %v519
        %521 = vmatmul.bf16.gmra.mxu0 %v484
        %v522 = vpop.f32.mrf.mxu0
        %v523 = vadd.f32 %v478, %v522
        %v524 = vpop.f32.mrf.mxu0
        %v525 = vadd.f32 %v478, %v524
        %526 = vmatmul.bf16.gmra.mxu0 %v487
        %v527 = vpop.f32.mrf.mxu0
        %v528 = vadd.f32 %v478, %v527
        %v529 = vpop.f32.mrf.mxu0
        %v530 = vadd.f32 %v478, %v529
        %531 = vmatmul.bf16.gmra.mxu0 %v490
        %v532 = vpop.f32.mrf.mxu0
        %v533 = vadd.f32 %v478, %v532
        %v534 = vpop.f32.mrf.mxu0
        %v535 = vadd.f32 %v478, %v534
        %536 = vmatmul.bf16.gmra.mxu0 %v493
        %v537 = vpop.f32.mrf.mxu0
        %v538 = vadd.f32 %v478, %v537
        %v539 = vpop.f32.mrf.mxu0
        %v540 = vadd.f32 %v478, %v539
        %541 = vmatmul.bf16.gmra.mxu0 %v496
        %v542 = vpop.f32.mrf.mxu0
        %v543 = vadd.f32 %v478, %v542
        %v544 = vpop.f32.mrf.mxu0
        %v545 = vadd.f32 %v478, %v544
        %546 = vmatmul.bf16.gmra.mxu0 %v499
        %v547 = vpop.f32.mrf.mxu0
        %v548 = vadd.f32 %v478, %v547
        %v549 = vpop.f32.mrf.mxu0
        %v550 = vadd.f32 %v478, %v549
        %551 = vmatmul.bf16.gmra.mxu0 %v502
        %v552 = vpop.f32.mrf.mxu0
        %v553 = vadd.f32 %v478, %v552
        %v554 = vpop.f32.mrf.mxu0
        %v555 = vadd.f32 %v478, %v554
        %556 = vdwg.mxu0
        %v557 = vmax.f32 %v518, 0.0
        %v558 = vmax.f32 %v520, 0.0
        %v559 = vmax.f32 %v523, 0.0
        %v560 = vmax.f32 %v525, 0.0
        %v561 = vmax.f32 %v528, 0.0
        %v562 = vmax.f32 %v530, 0.0
        %v563 = vmax.f32 %v533, 0.0
        %v564 = vmax.f32 %v535, 0.0
        %v565 = vmax.f32 %v538, 0.0
        %v566 = vmax.f32 %v540, 0.0
        %v567 = vmax.f32 %v543, 0.0
        %v568 = vmax.f32 %v545, 0.0
        %v569 = vmax.f32 %v548, 0.0
        %v570 = vmax.f32 %v550, 0.0
        %v571 = vmax.f32 %v553, 0.0
        %v572 = vmax.f32 %v555, 0.0
        %v573 = vpack.c.bf16 %v558, %v557
        %v574 = vpack.c.bf16 %v560, %v559
        %v575 = vpack.c.bf16 %v562, %v561
        %v576 = vpack.c.bf16 %v564, %v563
        %v577 = vpack.c.bf16 %v566, %v565
        %v578 = vpack.c.bf16 %v568, %v567
        %v579 = vpack.c.bf16 %v570, %v569
        %v580 = vpack.c.bf16 %v572, %v571
        %v589 = vunpack.c.l.b16 %v308
        %v590 = vunpack.c.l.b16 %v309
        %v591 = vunpack.c.l.b16 %v310
        %v592 = vunpack.c.l.b16 %v311
        %v593 = vunpack.c.l.b16 %v312
        %v594 = vunpack.c.l.b16 %v313
        %v595 = vunpack.c.l.b16 %v314
        %v596 = vunpack.c.l.b16 %v315
        %v597 = vpack.c.b16 %v590, %v589
        %v598 = vpack.c.b16 %v592, %v591
        %v599 = vpack.c.b16 %v594, %v593
        %v600 = vpack.c.b16 %v596, %v595
        %vm605 = vcmask 523264
        %v607 = vsel %vm605, %v573, 0
        %v610 = vsel %vm605, %v574, 0
        %v613 = vsel %vm605, %v575, 0
        %v616 = vsel %vm605, %v576, 0
        %v619 = vsel %vm605, %v577, 0
        %v622 = vsel %vm605, %v578, 0
        %v625 = vsel %vm605, %v579, 0
        %v628 = vsel %vm605, %v580, 0
        %630 = vmatpush.bf16.msra.mxu0 0
        %631 = vmatpush.bf16.msra.mxu0 0
        %632 = vmatpush.bf16.msra.mxu0 0
        %633 = vmatpush.bf16.msra.mxu0 0
        %634 = vmatpush.bf16.msra.mxu0 %v600
        %635 = vmatpush.bf16.msra.mxu0 %v599
        %636 = vmatpush.bf16.msra.mxu0 %v598
        %637 = vmatpush.bf16.msra.mxu0 %v597
        %638 = vmatmul.bf16.gmra.mxu0 %v607
        %v639 = vpop.f32.mrf.mxu0
        %v640 = vadd.f32 0.0, %v639
        %v641 = vpop.f32.mrf.mxu0
        %v642 = vadd.f32 0.0, %v641
        %643 = vmatmul.bf16.gmra.mxu0 %v610
        %v644 = vpop.f32.mrf.mxu0
        %v645 = vadd.f32 0.0, %v644
        %v646 = vpop.f32.mrf.mxu0
        %v647 = vadd.f32 0.0, %v646
        %648 = vmatmul.bf16.gmra.mxu0 %v613
        %v649 = vpop.f32.mrf.mxu0
        %v650 = vadd.f32 0.0, %v649
        %v651 = vpop.f32.mrf.mxu0
        %v652 = vadd.f32 0.0, %v651
        %653 = vmatmul.bf16.gmra.mxu0 %v616
        %v654 = vpop.f32.mrf.mxu0
        %v655 = vadd.f32 0.0, %v654
        %v656 = vpop.f32.mrf.mxu0
        %v657 = vadd.f32 0.0, %v656
        %658 = vmatmul.bf16.gmra.mxu0 %v619
        %v659 = vpop.f32.mrf.mxu0
        %v660 = vadd.f32 0.0, %v659
        %v661 = vpop.f32.mrf.mxu0
        %v662 = vadd.f32 0.0, %v661
        %663 = vmatmul.bf16.gmra.mxu0 %v622
        %v664 = vpop.f32.mrf.mxu0
        %v665 = vadd.f32 0.0, %v664
        %v666 = vpop.f32.mrf.mxu0
        %v667 = vadd.f32 0.0, %v666
        %668 = vmatmul.bf16.gmra.mxu0 %v625
        %v669 = vpop.f32.mrf.mxu0
        %v670 = vadd.f32 0.0, %v669
        %v671 = vpop.f32.mrf.mxu0
        %v672 = vadd.f32 0.0, %v671
        %673 = vmatmul.bf16.gmra.mxu0 %v628
        %v674 = vpop.f32.mrf.mxu0
        %v675 = vadd.f32 0.0, %v674
        %v676 = vpop.f32.mrf.mxu0
        %v677 = vadd.f32 0.0, %v676
        %678 = vdwg.mxu0
        %v679 = vpack.c.bf16 %v642, %v640
        %v680 = vpack.c.bf16 %v647, %v645
        %v681 = vpack.c.bf16 %v652, %v650
        %v682 = vpack.c.bf16 %v657, %v655
        %v683 = vpack.c.bf16 %v662, %v660
        %v684 = vpack.c.bf16 %v667, %v665
        %v685 = vpack.c.bf16 %v672, %v670
        %v686 = vpack.c.bf16 %v677, %v675
        %v687 = vperm.slane %v307, 1
        %688 = vmatpush.bf16.msra.mxu0 %v686
        %689 = vmatpush.bf16.msra.mxu0 %v685
        %690 = vmatpush.bf16.msra.mxu0 %v684
        %691 = vmatpush.bf16.msra.mxu0 %v683
        %692 = vmatpush.bf16.msra.mxu0 %v682
        %693 = vmatpush.bf16.msra.mxu0 %v681
        %694 = vmatpush.bf16.msra.mxu0 %v680
        %695 = vmatpush.bf16.msra.mxu0 %v679
        %696 = vmatmul.bf16.gmra.mxu0 %v356
        %v697 = vpop.f32.mrf.mxu0
        %v698 = vadd.f32 %v687, %v697
        %v699 = vpop.f32.mrf.mxu0
        %v700 = vadd.f32 %v687, %v699
        %701 = vmatmul.bf16.gmra.mxu0 %v357
        %v702 = vpop.f32.mrf.mxu0
        %v703 = vadd.f32 %v687, %v702
        %v704 = vpop.f32.mrf.mxu0
        %v705 = vadd.f32 %v687, %v704
        %706 = vmatmul.bf16.gmra.mxu0 %v358
        %v707 = vpop.f32.mrf.mxu0
        %v708 = vadd.f32 %v687, %v707
        %v709 = vpop.f32.mrf.mxu0
        %v710 = vadd.f32 %v687, %v709
        %711 = vmatmul.bf16.gmra.mxu0 %v359
        %v712 = vpop.f32.mrf.mxu0
        %v713 = vadd.f32 %v687, %v712
        %v714 = vpop.f32.mrf.mxu0
        %v715 = vadd.f32 %v687, %v714
        %716 = vmatmul.bf16.gmra.mxu0 %v360
        %v717 = vpop.f32.mrf.mxu0
        %v718 = vadd.f32 %v687, %v717
        %v719 = vpop.f32.mrf.mxu0
        %v720 = vadd.f32 %v687, %v719
        %721 = vmatmul.bf16.gmra.mxu0 %v361
        %v722 = vpop.f32.mrf.mxu0
        %v723 = vadd.f32 %v687, %v722
        %v724 = vpop.f32.mrf.mxu0
        %v725 = vadd.f32 %v687, %v724
        %726 = vmatmul.bf16.gmra.mxu0 %v362
        %v727 = vpop.f32.mrf.mxu0
        %v728 = vadd.f32 %v687, %v727
        %v729 = vpop.f32.mrf.mxu0
        %v730 = vadd.f32 %v687, %v729
        %731 = vmatmul.bf16.gmra.mxu0 %v363
        %v732 = vpop.f32.mrf.mxu0
        %v733 = vadd.f32 %v687, %v732
        %v734 = vpop.f32.mrf.mxu0
        %v735 = vadd.f32 %v687, %v734
        %736 = vdwg.mxu0
        %v737 = vmax.f32 %v698, 0.0
        %v738 = vmax.f32 %v700, 0.0
        %v739 = vmax.f32 %v703, 0.0
        %v740 = vmax.f32 %v705, 0.0
        %v741 = vmax.f32 %v708, 0.0
        %v742 = vmax.f32 %v710, 0.0
        %v743 = vmax.f32 %v713, 0.0
        %v744 = vmax.f32 %v715, 0.0
        %v745 = vmax.f32 %v718, 0.0
        %v746 = vmax.f32 %v720, 0.0
        %v747 = vmax.f32 %v723, 0.0
        %v748 = vmax.f32 %v725, 0.0
        %v749 = vmax.f32 %v728, 0.0
        %v750 = vmax.f32 %v730, 0.0
        %v751 = vmax.f32 %v733, 0.0
        %v752 = vmax.f32 %v735, 0.0
        %v753 = vpack.c.bf16 %v738, %v737
        %v754 = vpack.c.bf16 %v740, %v739
        %v755 = vpack.c.bf16 %v742, %v741
        %v756 = vpack.c.bf16 %v744, %v743
        %v757 = vpack.c.bf16 %v746, %v745
        %v758 = vpack.c.bf16 %v748, %v747
        %v759 = vpack.c.bf16 %v750, %v749
        %v760 = vpack.c.bf16 %v752, %v751
        %v769 = vunpack.c.l.b16 %v316
        %v770 = vunpack.c.l.b16 %v317
        %v771 = vunpack.c.l.b16 %v318
        %v772 = vunpack.c.l.b16 %v319
        %v773 = vunpack.c.l.b16 %v320
        %v774 = vunpack.c.l.b16 %v321
        %v775 = vunpack.c.l.b16 %v322
        %v776 = vunpack.c.l.b16 %v323
        %v777 = vpack.c.b16 %v770, %v769
        %v778 = vpack.c.b16 %v772, %v771
        %v779 = vpack.c.b16 %v774, %v773
        %v780 = vpack.c.b16 %v776, %v775
        %v786 = vsel %vm605, %v753, 0
        %v789 = vsel %vm605, %v754, 0
        %v792 = vsel %vm605, %v755, 0
        %v795 = vsel %vm605, %v756, 0
        %v798 = vsel %vm605, %v757, 0
        %v801 = vsel %vm605, %v758, 0
        %v804 = vsel %vm605, %v759, 0
        %v807 = vsel %vm605, %v760, 0
        %809 = vmatpush.bf16.msra.mxu0 0
        %810 = vmatpush.bf16.msra.mxu0 0
        %811 = vmatpush.bf16.msra.mxu0 0
        %812 = vmatpush.bf16.msra.mxu0 0
        %813 = vmatpush.bf16.msra.mxu0 %v780
        %814 = vmatpush.bf16.msra.mxu0 %v779
        %815 = vmatpush.bf16.msra.mxu0 %v778
        %816 = vmatpush.bf16.msra.mxu0 %v777
        %817 = vmatmul.bf16.gmra.mxu0 %v786
        %v818 = vpop.f32.mrf.mxu0
        %v819 = vadd.f32 0.0, %v818
        %v820 = vpop.f32.mrf.mxu0
        %v821 = vadd.f32 0.0, %v820
        %822 = vmatmul.bf16.gmra.mxu0 %v789
        %v823 = vpop.f32.mrf.mxu0
        %v824 = vadd.f32 0.0, %v823
        %v825 = vpop.f32.mrf.mxu0
        %v826 = vadd.f32 0.0, %v825
        %827 = vmatmul.bf16.gmra.mxu0 %v792
        %v828 = vpop.f32.mrf.mxu0
        %v829 = vadd.f32 0.0, %v828
        %v830 = vpop.f32.mrf.mxu0
        %v831 = vadd.f32 0.0, %v830
        %832 = vmatmul.bf16.gmra.mxu0 %v795
        %v833 = vpop.f32.mrf.mxu0
        %v834 = vadd.f32 0.0, %v833
        %v835 = vpop.f32.mrf.mxu0
        %v836 = vadd.f32 0.0, %v835
        %837 = vmatmul.bf16.gmra.mxu0 %v798
        %v838 = vpop.f32.mrf.mxu0
        %v839 = vadd.f32 0.0, %v838
        %v840 = vpop.f32.mrf.mxu0
        %v841 = vadd.f32 0.0, %v840
        %842 = vmatmul.bf16.gmra.mxu0 %v801
        %v843 = vpop.f32.mrf.mxu0
        %v844 = vadd.f32 0.0, %v843
        %v845 = vpop.f32.mrf.mxu0
        %v846 = vadd.f32 0.0, %v845
        %847 = vmatmul.bf16.gmra.mxu0 %v804
        %v848 = vpop.f32.mrf.mxu0
        %v849 = vadd.f32 0.0, %v848
        %v850 = vpop.f32.mrf.mxu0
        %v851 = vadd.f32 0.0, %v850
        %852 = vmatmul.bf16.gmra.mxu0 %v807
        %v853 = vpop.f32.mrf.mxu0
        %v854 = vadd.f32 0.0, %v853
        %v855 = vpop.f32.mrf.mxu0
        %v856 = vadd.f32 0.0, %v855
        %857 = vdwg.mxu0
        %v858 = vpack.c.bf16 %v821, %v819
        %v859 = vpack.c.bf16 %v826, %v824
        %v860 = vpack.c.bf16 %v831, %v829
        %v861 = vpack.c.bf16 %v836, %v834
        %v862 = vpack.c.bf16 %v841, %v839
        %v863 = vpack.c.bf16 %v846, %v844
        %v864 = vpack.c.bf16 %v851, %v849
        %v865 = vpack.c.bf16 %v856, %v854
        %v866 = vperm.slane %v307, 2
        %867 = vmatpush.bf16.msra.mxu0 %v865
        %868 = vmatpush.bf16.msra.mxu0 %v864
        %869 = vmatpush.bf16.msra.mxu0 %v863
        %870 = vmatpush.bf16.msra.mxu0 %v862
        %871 = vmatpush.bf16.msra.mxu0 %v861
        %872 = vmatpush.bf16.msra.mxu0 %v860
        %873 = vmatpush.bf16.msra.mxu0 %v859
        %874 = vmatpush.bf16.msra.mxu0 %v858
        %875 = vmatmul.bf16.gmra.mxu0 %v356
        %v876 = vpop.f32.mrf.mxu0
        %v877 = vadd.f32 %v866, %v876
        %v878 = vpop.f32.mrf.mxu0
        %v879 = vadd.f32 %v866, %v878
        %880 = vmatmul.bf16.gmra.mxu0 %v357
        %v881 = vpop.f32.mrf.mxu0
        %v882 = vadd.f32 %v866, %v881
        %v883 = vpop.f32.mrf.mxu0
        %v884 = vadd.f32 %v866, %v883
        %885 = vmatmul.bf16.gmra.mxu0 %v358
        %v886 = vpop.f32.mrf.mxu0
        %v887 = vadd.f32 %v866, %v886
        %v888 = vpop.f32.mrf.mxu0
        %v889 = vadd.f32 %v866, %v888
        %890 = vmatmul.bf16.gmra.mxu0 %v359
        %v891 = vpop.f32.mrf.mxu0
        %v892 = vadd.f32 %v866, %v891
        %v893 = vpop.f32.mrf.mxu0
        %v894 = vadd.f32 %v866, %v893
        %895 = vmatmul.bf16.gmra.mxu0 %v360
        %v896 = vpop.f32.mrf.mxu0
        %v897 = vadd.f32 %v866, %v896
        %v898 = vpop.f32.mrf.mxu0
        %v899 = vadd.f32 %v866, %v898
        %900 = vmatmul.bf16.gmra.mxu0 %v361
        %v901 = vpop.f32.mrf.mxu0
        %v902 = vadd.f32 %v866, %v901
        %v903 = vpop.f32.mrf.mxu0
        %v904 = vadd.f32 %v866, %v903
        %905 = vmatmul.bf16.gmra.mxu0 %v362
        %v906 = vpop.f32.mrf.mxu0
        %v907 = vadd.f32 %v866, %v906
        %v908 = vpop.f32.mrf.mxu0
        %v909 = vadd.f32 %v866, %v908
        %910 = vmatmul.bf16.gmra.mxu0 %v363
        %v911 = vpop.f32.mrf.mxu0
        %v912 = vadd.f32 %v866, %v911
        %v913 = vpop.f32.mrf.mxu0
        %v914 = vadd.f32 %v866, %v913
        %915 = vdwg.mxu0
        %v916 = vmax.f32 %v877, 0.0
        %v917 = vmax.f32 %v879, 0.0
        %v918 = vmax.f32 %v882, 0.0
        %v919 = vmax.f32 %v884, 0.0
        %v920 = vmax.f32 %v887, 0.0
        %v921 = vmax.f32 %v889, 0.0
        %v922 = vmax.f32 %v892, 0.0
        %v923 = vmax.f32 %v894, 0.0
        %v924 = vmax.f32 %v897, 0.0
        %v925 = vmax.f32 %v899, 0.0
        %v926 = vmax.f32 %v902, 0.0
        %v927 = vmax.f32 %v904, 0.0
        %v928 = vmax.f32 %v907, 0.0
        %v929 = vmax.f32 %v909, 0.0
        %v930 = vmax.f32 %v912, 0.0
        %v931 = vmax.f32 %v914, 0.0
        %v932 = vld [vmem:[%s2] sm:$0xf]
        %v933 = vld [vmem:[%s2 + $0x4] sm:$0xf]
        %v934 = vpack.c.bf16 %v917, %v916
        %v935 = vpack.c.bf16 %v919, %v918
        %v936 = vpack.c.bf16 %v921, %v920
        %v937 = vpack.c.bf16 %v923, %v922
        %v938 = vpack.c.bf16 %v925, %v924
        %v939 = vpack.c.bf16 %v927, %v926
        %v940 = vpack.c.bf16 %v929, %v928
        %v941 = vpack.c.bf16 %v931, %v930
        %v944 = vunpack.c.l.b16 %v932
        %v945 = vunpack.c.l.b16 %v933
        %v946 = vpack.c.b16 %v945, %v944
        %948 = vmatpush.bf16.msra.mxu0 %v941
        %949 = vmatpush.bf16.msra.mxu0 %v940
        %950 = vmatpush.bf16.msra.mxu0 %v939
        %951 = vmatpush.bf16.msra.mxu0 %v938
        %952 = vmatpush.bf16.msra.mxu0 %v937
        %953 = vmatpush.bf16.msra.mxu0 %v936
        %954 = vmatpush.bf16.msra.mxu0 %v935
        %955 = vmatpush.bf16.msra.mxu0 %v934
        %956 = vmatmul.bf16.gmra.mxu0 %v946
        %v957 = vpop.f32.mrf.mxu0
        %v958 = vadd.f32 0.0, %v957
        %v959 = vpop.f32.mrf.mxu0
        %v960 = vadd.f32 0.0, %v959
        %961 = vdwg.mxu0
        %963 = vrot.lane.b32.xlu0 %v960, 64
        %v964 = vpop.permute.xlu0 %963
        %v966 = vsel %vm605, %v958, %v964
        %967 = vst [vmem:[%s261] sm:$0xff] %v966
        %s968 = sand.u32 %s164, 1
        %s969 = scalar_lea.sflag [#allocation3], %s968
        %s970 = sand.u32 %s164, 1
        %s971 = smul.addr %s970, 8
        %s972 = scalar_lea.vmem [#allocation2], %s971
        // Predicated region
        $region45: #{tpu_custom_call.1} parent=43 // pred_check
          %p973 = pneg %p174
        $region46: #{tpu_custom_call.1} parent=43 // pred_check_branch
          %975 = sbr.rel (%p973) target = $region48
        $region47: #{tpu_custom_call.1} parent=43 // pred_region
          %977 = vsyncadd %s969, 0
          %s978 = smul.addr %s20, 8
          %s979 = scalar_lea.hbm %s6, %s978
          %s981 = sshll.u32 %s972, 4
          %s982 = int_to_ptr.vmem [resolvable:$true] %s981
          %s983 = sshll.u32 %s979, 4
          %s984 = int_to_ptr.hbm [resolvable:$true] %s983
          %986 = dma.vmem_to_hbm [thread:$0]  %s982, 128, %s984, %s969
        $region48: #{tpu_custom_call.1} parent=43 // pred_fallthru
          _
      $region44: #{tpu_custom_call.1} parent=5 // pred_fallthru
        _
      %p987 = scmp.le.s32.totalorder 2, %s15
      // Predicated region
      $region49: #{tpu_custom_call.1} parent=5 // pred_check
        %p988 = pneg %p987
      $region50: #{tpu_custom_call.1} parent=5 // pred_check_branch
        %990 = sbr.rel (%p988) target = $region52
      $region51: #{tpu_custom_call.1} parent=5 // pred_region
        %s991 = ssub.s32 %s15, 2
        // Predicated region
        $region53: #{tpu_custom_call.1} parent=51 // pred_check
          %p992 = pneg %p180
        $region54: #{tpu_custom_call.1} parent=51 // pred_check_branch
          %994 = sbr.rel (%p992) target = $region56
        $region55: #{tpu_custom_call.1} parent=51 // pred_region
          %s995 = sand.u32 %s165, 1
          %s996 = scalar_lea.sflag [#allocation3], %s995
          %s997 = sand.u32 %s165, 1
          %s998 = smul.addr %s997, 8
          %s999 = scalar_lea.vmem [#allocation2], %s998
          %1001 = dma.done %s996, 128
        $region56: #{tpu_custom_call.1} parent=51 // pred_fallthru
          _
      $region52: #{tpu_custom_call.1} parent=5 // pred_fallthru
        _
    $region6: #{tpu_custom_call.1} parent=1 // loop_footer
      %s19 = sadd.s32 1, %s15
    $region7: #{tpu_custom_call.1} parent=1 // loop_footer_branch
      %14 = sbr.rel target = $region3
    $region8: #{tpu_custom_call.1} parent=1 // loop_exit
      _
    %1002 = vsyncpa [#allocation3], 1
    %s1003 = scalar_lea.sflag [#allocation3], 1
    %1004 = vsyncpa %s1003, 1

</llo_original>
